<compile_context>
chip_gen: v5e
topology: v5e:2x2
jax: 0.10.0
libtpu: 0.0.40
codegen_flags: <defaults>
</compile_context>

<pallas_src>
import jax
import jax.numpy as jnp
from jax.experimental import pallas as pl
from jax.experimental.pallas import tpu as pltpu

_SUB = 8      # f32 sublane tile height
_LANE = 128   # lane tile width


def _spatial_attention_kernel(x_ref, w_ref, b_ref, o_ref, pad_ref):
    # x_ref : (1, C, H, W) VMEM input block
    # w_ref : (9,) f32 SMEM  -- 3x3 conv weights, row-major
    # b_ref : (1,) f32 SMEM  -- conv bias
    # o_ref : (1, 1, H, W) VMEM output block
    # pad_ref: (H + 2*_SUB, W + 2*_LANE) f32 VMEM scratch (zero-padded map)
    _, C, H, W = x_ref.shape

    x = x_ref[0]                                        # (C, H, W)
    avg = jnp.mean(x, axis=0, dtype=jnp.float32)        # f32 accumulation
    mx = jnp.max(x, axis=0).astype(jnp.float32)
    pooled = avg + mx                                   # (H, W) f32

    # Zero-padded map: interior stored at the (8,128)-aligned origin so the
    # store needs no relayout; the surrounding zeros implement conv padding=1.
    pad_ref[...] = jnp.zeros((H + 2 * _SUB, W + 2 * _LANE), jnp.float32)
    pad_ref[_SUB:_SUB + H, _LANE:_LANE + W] = pooled

    # 3x3 cross-correlation with padding=1 (PyTorch Conv2d semantics) + bias.
    acc = jnp.zeros((H, W), jnp.float32) + b_ref[0]
    for di in range(3):
        for dj in range(3):
            r0 = _SUB + di - 1
            c0 = _LANE + dj - 1
            acc = acc + w_ref[3 * di + dj] * pad_ref[r0:r0 + H, c0:c0 + W]

    o_ref[0, 0] = jax.nn.sigmoid(acc).astype(o_ref.dtype)


def spatial_attention(x, conv_w, conv_b):
    """x: (B, C, H, W); conv_w: (1, 1, 3, 3); conv_b: (1,). Returns (B, 1, H, W)."""
    B, C, H, W = x.shape
    w_flat = conv_w.reshape(9).astype(jnp.float32)   # pre-cast once in wrapper
    bias = conv_b.reshape(1).astype(jnp.float32)

    return pl.pallas_call(
        _spatial_attention_kernel,
        out_shape=jax.ShapeDtypeStruct((B, 1, H, W), x.dtype),
        grid_spec=pltpu.PrefetchScalarGridSpec(
            num_scalar_prefetch=0,
            grid=(B,),
            in_specs=[
                pl.BlockSpec((1, C, H, W), lambda b: (b, 0, 0, 0)),
                pl.BlockSpec(memory_space=pltpu.MemorySpace.SMEM),
                pl.BlockSpec(memory_space=pltpu.MemorySpace.SMEM),
            ],
            out_specs=pl.BlockSpec((1, 1, H, W), lambda b: (b, 0, 0, 0)),
            scratch_shapes=[
                pltpu.VMEM((H + 2 * _SUB, W + 2 * _LANE), jnp.float32),
            ],
        ),
        compiler_params=pltpu.CompilerParams(
            dimension_semantics=("parallel",)),
    )(x, w_flat, bias)


def spatial_attention_ref(x, conv_w, conv_b):
    """Pure-JAX reference matching the PyTorch forward."""
    avg = jnp.mean(x, axis=1, keepdims=True)
    mx = jnp.max(x, axis=1, keepdims=True)
    s = avg + mx
    out = jax.lax.conv_general_dilated(
        s, conv_w, window_strides=(1, 1), padding=((1, 1), (1, 1)),
        dimension_numbers=("NCHW", "OIHW", "NCHW"))
    return jax.nn.sigmoid(out + conv_b.reshape(1, 1, 1, 1))


if __name__ == "__main__":
    B, C, H, W = 2, 4, 16, 16

    key = jax.random.PRNGKey(0)
    kx, kw, kb = jax.random.split(key, 3)
    x = jax.random.normal(kx, (B, C, H, W), dtype=jnp.float32)
    # Deterministic synthetic Conv2d(1, 1, 3, padding=1) parameters.
    conv_w = jax.random.normal(kw, (1, 1, 3, 3), dtype=jnp.float32) * 0.5
    conv_b = jax.random.normal(kb, (1,), dtype=jnp.float32) * 0.1

    out = spatial_attention(x, conv_w, conv_b)
    out = jax.block_until_ready(out)

    ref = spatial_attention_ref(x, conv_w, conv_b)
    assert out.shape == (B, 1, H, W)
    assert jnp.allclose(out, ref, atol=1e-5, rtol=1e-5), "mismatch vs reference"

    print("KERNEL_OK")
</pallas_src>

<mosaic_0001>
module attributes {stable_mosaic.version = 11 : i64} {
  func.func @_spatial_attention_kernel(%arg0: i32, %arg1: memref<1x4x16x16xf32, #tpu.memory_space<vmem>>, %arg2: memref<9xf32, #tpu.memory_space<smem>>, %arg3: memref<1xf32, #tpu.memory_space<smem>>, %arg4: memref<1x1x16x16xf32, #tpu.memory_space<vmem>>, %arg5: memref<32x272xf32, #tpu.memory_space<vmem>>) attributes {dimension_semantics = [#tpu.dimension_semantics<parallel>], iteration_bounds = array<i64: 2>, scalar_prefetch = 0 : i64, scratch_operands = 1 : i64, tpu.core_type = #tpu.core_type<tc>, window_params = [{transform_indices = @transform_0, window_bounds = array<i64: 1, 4, 16, 16>}, {transform_indices = @transform_1, window_bounds = array<i64: 9>}, {transform_indices = @transform_2, window_bounds = array<i64: 1>}, {transform_indices = @transform_3, window_bounds = array<i64: 1, 1, 16, 16>}]} {
    %c0 = arith.constant 0 : index
    %c0_0 = arith.constant 0 : index
    %c0_1 = arith.constant 0 : index
    %c0_2 = arith.constant 0 : index
    %0 = vector.load %arg1[%c0, %c0_0, %c0_1, %c0_2] : memref<1x4x16x16xf32, #tpu.memory_space<vmem>>, vector<1x4x16x16xf32>
    %1 = vector.shape_cast %0 : vector<1x4x16x16xf32> to vector<4x16x16xf32>
    %cst = arith.constant dense<0.000000e+00> : vector<16x16xf32>
    %2 = vector.multi_reduction <add>, %1, %cst [0] : vector<4x16x16xf32> to vector<16x16xf32>
    %cst_3 = arith.constant 4.000000e+00 : f32
    %3 = vector.broadcast %cst_3 : f32 to vector<16x16xf32>
    %4 = arith.divf %2, %3 : vector<16x16xf32>
    %cst_4 = arith.constant dense<0xFF800000> : vector<16x16xf32>
    %5 = vector.multi_reduction <maximumf>, %1, %cst_4 [0] : vector<4x16x16xf32> to vector<16x16xf32>
    %6 = arith.addf %4, %5 : vector<16x16xf32>
    %cst_5 = arith.constant 0.000000e+00 : f32
    %7 = vector.broadcast %cst_5 : f32 to vector<32x272xf32>
    %c0_6 = arith.constant 0 : index
    %c0_7 = arith.constant 0 : index
    %8 = vector.load %arg5[%c0_6, %c0_7] : memref<32x272xf32, #tpu.memory_space<vmem>>, vector<32x272xf32>
    tpu.vector_store %arg5[%c0_6, %c0_7], %7 {strides = array<i32>} : memref<32x272xf32, #tpu.memory_space<vmem>>, vector<32x272xf32>,
    %c8 = arith.constant 8 : index
    %c128 = arith.constant 128 : index
    %9 = vector.load %arg5[%c8, %c128] : memref<32x272xf32, #tpu.memory_space<vmem>>, vector<16x16xf32>
    tpu.vector_store %arg5[%c8, %c128], %6 {strides = array<i32>} : memref<32x272xf32, #tpu.memory_space<vmem>>, vector<16x16xf32>,
    %cst_8 = arith.constant 0.000000e+00 : f32
    %10 = vector.broadcast %cst_8 : f32 to vector<16x16xf32>
    %c0_9 = arith.constant 0 : index
    %11 = memref.load %arg3[%c0_9] : memref<1xf32, #tpu.memory_space<smem>>
    %12 = vector.broadcast %11 : f32 to vector<16x16xf32>
    %13 = arith.addf %10, %12 : vector<16x16xf32>
    %c0_10 = arith.constant 0 : index
    %14 = memref.load %arg2[%c0_10] : memref<9xf32, #tpu.memory_space<smem>>
    %c7 = arith.constant 7 : index
    %c127 = arith.constant 127 : index
    %15 = vector.load %arg5[%c7, %c127] : memref<32x272xf32, #tpu.memory_space<vmem>>, vector<16x16xf32>
    %16 = vector.broadcast %14 : f32 to vector<16x16xf32>
    %17 = arith.mulf %16, %15 : vector<16x16xf32>
    %18 = arith.addf %13, %17 : vector<16x16xf32>
    %c1 = arith.constant 1 : index
    %19 = memref.load %arg2[%c1] : memref<9xf32, #tpu.memory_space<smem>>
    %c7_11 = arith.constant 7 : index
    %c128_12 = arith.constant 128 : index
    %20 = vector.load %arg5[%c7_11, %c128_12] : memref<32x272xf32, #tpu.memory_space<vmem>>, vector<16x16xf32>
    %21 = vector.broadcast %19 : f32 to vector<16x16xf32>
    %22 = arith.mulf %21, %20 : vector<16x16xf32>
    %23 = arith.addf %18, %22 : vector<16x16xf32>
    %c2 = arith.constant 2 : index
    %24 = memref.load %arg2[%c2] : memref<9xf32, #tpu.memory_space<smem>>
    %c7_13 = arith.constant 7 : index
    %c129 = arith.constant 129 : index
    %25 = vector.load %arg5[%c7_13, %c129] : memref<32x272xf32, #tpu.memory_space<vmem>>, vector<16x16xf32>
    %26 = vector.broadcast %24 : f32 to vector<16x16xf32>
    %27 = arith.mulf %26, %25 : vector<16x16xf32>
    %28 = arith.addf %23, %27 : vector<16x16xf32>
    %c3 = arith.constant 3 : index
    %29 = memref.load %arg2[%c3] : memref<9xf32, #tpu.memory_space<smem>>
    %c8_14 = arith.constant 8 : index
    %c127_15 = arith.constant 127 : index
    %30 = vector.load %arg5[%c8_14, %c127_15] : memref<32x272xf32, #tpu.memory_space<vmem>>, vector<16x16xf32>
    %31 = vector.broadcast %29 : f32 to vector<16x16xf32>
    %32 = arith.mulf %31, %30 : vector<16x16xf32>
    %33 = arith.addf %28, %32 : vector<16x16xf32>
    %c4 = arith.constant 4 : index
    %34 = memref.load %arg2[%c4] : memref<9xf32, #tpu.memory_space<smem>>
    %c8_16 = arith.constant 8 : index
    %c128_17 = arith.constant 128 : index
    %35 = vector.load %arg5[%c8_16, %c128_17] : memref<32x272xf32, #tpu.memory_space<vmem>>, vector<16x16xf32>
    %36 = vector.broadcast %34 : f32 to vector<16x16xf32>
    %37 = arith.mulf %36, %35 : vector<16x16xf32>
    %38 = arith.addf %33, %37 : vector<16x16xf32>
    %c5 = arith.constant 5 : index
    %39 = memref.load %arg2[%c5] : memref<9xf32, #tpu.memory_space<smem>>
    %c8_18 = arith.constant 8 : index
    %c129_19 = arith.constant 129 : index
    %40 = vector.load %arg5[%c8_18, %c129_19] : memref<32x272xf32, #tpu.memory_space<vmem>>, vector<16x16xf32>
    %41 = vector.broadcast %39 : f32 to vector<16x16xf32>
    %42 = arith.mulf %41, %40 : vector<16x16xf32>
    %43 = arith.addf %38, %42 : vector<16x16xf32>
    %c6 = arith.constant 6 : index
    %44 = memref.load %arg2[%c6] : memref<9xf32, #tpu.memory_space<smem>>
    %c9 = arith.constant 9 : index
    %c127_20 = arith.constant 127 : index
    %45 = vector.load %arg5[%c9, %c127_20] : memref<32x272xf32, #tpu.memory_space<vmem>>, vector<16x16xf32>
    %46 = vector.broadcast %44 : f32 to vector<16x16xf32>
    %47 = arith.mulf %46, %45 : vector<16x16xf32>
    %48 = arith.addf %43, %47 : vector<16x16xf32>
    %c7_21 = arith.constant 7 : index
    %49 = memref.load %arg2[%c7_21] : memref<9xf32, #tpu.memory_space<smem>>
    %c9_22 = arith.constant 9 : index
    %c128_23 = arith.constant 128 : index
    %50 = vector.load %arg5[%c9_22, %c128_23] : memref<32x272xf32, #tpu.memory_space<vmem>>, vector<16x16xf32>
    %51 = vector.broadcast %49 : f32 to vector<16x16xf32>
    %52 = arith.mulf %51, %50 : vector<16x16xf32>
    %53 = arith.addf %48, %52 : vector<16x16xf32>
    %c8_24 = arith.constant 8 : index
    %54 = memref.load %arg2[%c8_24] : memref<9xf32, #tpu.memory_space<smem>>
    %c9_25 = arith.constant 9 : index
    %c129_26 = arith.constant 129 : index
    %55 = vector.load %arg5[%c9_25, %c129_26] : memref<32x272xf32, #tpu.memory_space<vmem>>, vector<16x16xf32>
    %56 = vector.broadcast %54 : f32 to vector<16x16xf32>
    %57 = arith.mulf %56, %55 : vector<16x16xf32>
    %58 = arith.addf %53, %57 : vector<16x16xf32>
    %59 = arith.negf %58 : vector<16x16xf32>
    %60 = math.exp %59 : vector<16x16xf32>
    %cst_27 = arith.constant 1.000000e+00 : f32
    %61 = vector.broadcast %cst_27 : f32 to vector<16x16xf32>
    %62 = arith.addf %61, %60 : vector<16x16xf32>
    %63 = arith.divf %61, %62 : vector<16x16xf32>
    %c0_28 = arith.constant 0 : index
    %c0_29 = arith.constant 0 : index
    %c0_30 = arith.constant 0 : index
    %c0_31 = arith.constant 0 : index
    %64 = vector.load %arg4[%c0_28, %c0_29, %c0_30, %c0_31] : memref<1x1x16x16xf32, #tpu.memory_space<vmem>>, vector<1x1x16x16xf32>
    %65 = vector.shape_cast %64 : vector<1x1x16x16xf32> to vector<16x16xf32>
    %66 = vector.shape_cast %63 : vector<16x16xf32> to vector<1x1x16x16xf32>
    tpu.vector_store %arg4[%c0_28, %c0_29, %c0_30, %c0_31], %66 {strides = array<i32>} : memref<1x1x16x16xf32, #tpu.memory_space<vmem>>, vector<1x1x16x16xf32>,
    return
  }
  func.func @transform_0(%arg0: i32) -> (i32, i32, i32, i32) {
    %c0_i32 = arith.constant 0 : i32
    %c0_i32_0 = arith.constant 0 : i32
    %c0_i32_1 = arith.constant 0 : i32
    %c0_i32_2 = arith.constant 0 : i32
    return %arg0, %c0_i32, %c0_i32_0, %c0_i32_1 : i32, i32, i32, i32
  }
  func.func @transform_1(%arg0: i32) -> i32 {
    %c0_i32 = arith.constant 0 : i32
    %c0_i32_0 = arith.constant 0 : i32
    return %c0_i32 : i32
  }
  func.func @transform_2(%arg0: i32) -> i32 {
    %c0_i32 = arith.constant 0 : i32
    %c0_i32_0 = arith.constant 0 : i32
    return %c0_i32 : i32
  }
  func.func @transform_3(%arg0: i32) -> (i32, i32, i32, i32) {
    %c0_i32 = arith.constant 0 : i32
    %c0_i32_0 = arith.constant 0 : i32
    %c0_i32_1 = arith.constant 0 : i32
    %c0_i32_2 = arith.constant 0 : i32
    return %arg0, %c0_i32, %c0_i32_0, %c0_i32_1 : i32, i32, i32, i32
  }
}

</mosaic_0001>

<llo_original>
// kernel: tpu_custom_call.1
$region0: #{tpu_custom_call.1}
  #allocation0 [shape = 'u32[]', space=smem, size = 0x4, offset = 0x4, fixed_abs, tag = 'smem constant byte address 0x4 - core index']
  #allocation1 [shape = 'u32[72,128]{1,0:T(1,128)}', space=vmem, size = 0x9000, scoped, tag = 'internal scratch']
  #allocation2 [shape = 'f32[32,272]{1,0:T(8,128)}', space=vmem, size = 0xc000, scoped, tag = 'scratch operand']
  #allocation3 [shape = 'f32[1]{0:T(128)S(6)}', space=smem, size = 0x200, scoped, tag = 'scoped memory for tpu_custom_call.1']
  %s0 = inlined_call_operand.hbm [shape: f32[2,4,16,16], index: 0, kind: input, shape index: {}]
  %s1 = inlined_call_operand.vmem [shape: f32[9], index: 1, kind: input, shape index: {}]
  %s2 = inlined_call_operand.<no memory space> [shape: f32[1], index: 2, kind: input, shape index: {}]
  %s3 = inlined_call_operand.hbm [shape: f32[2,1,16,16], index: 3, kind: output, shape index: {}]
  %s4 = sld [smem:[#allocation0]]
  $region53: #{tpu_custom_call.1} parent=0
    _
  %s6 = ssub.s32 1, %s4
  %s7 = scalar_select 0, %s6, %s4
  %8 = sst [smem:[#allocation3]] %s2
  $region1: #{tpu_custom_call.1} parent=0
    #allocation4 [shape = 'u8[65536]{0}', space=vmem, size = 0x10000, scoped, tag = 'input window, operand 0']
    #allocation5 [shape = 's32[2]{0}', space=sflag, size = 0x8, scoped, tag = 'scoped memory for tpu_custom_call.1']
    #allocation6 [shape = 's32[2]{0}', space=sflag, size = 0x8, scoped, tag = 'scoped memory for tpu_custom_call.1']
    #allocation7 [shape = 's32[2]{0}', space=sflag, size = 0x8, scoped, tag = 'scoped memory for tpu_custom_call.1']
    #allocation8 [shape = 'u8[512]{0}', space=smem, size = 0x200, scoped, tag = 'input window, operand 1, single buffered']
    #allocation9 [shape = 'u8[16384]{0}', space=vmem, size = 0x4000, scoped, tag = 'output window, operand 0']
    %9 = vsyncpa [#allocation5], 0
    %s10 = scalar_lea.sflag [#allocation5], 1
    %11 = vsyncpa %s10, 0
    %12 = vsyncpa [#allocation7], 0
    %13 = vsyncpa [#allocation6], 0
    %s14 = scalar_lea.sflag [#allocation6], 1
    %15 = vsyncpa %s14, 0
    loop: start=0, step=1, limit=4
    $region2: #{tpu_custom_call.1} parent=1 // loop_pre_header
      _
    $region3: #{tpu_custom_call.1} parent=1 // loop_header
      %s17 = sphi 0, %s21
      %p18 = scmp.ge.s32.totalorder %s17, 4
      %s27 = sphi 0, %s29
      %s30 = sphi 0, %s27
      %s31 = sphi 0, %s30
      %s47 = sphi 0, %s31
      %s51 = sphi 0, %s51
      %s53 = sphi 0, %s51
      %s54 = sphi 0, %s53
      %s68 = sphi 0, %s54
      %s72 = sphi 0, %s72
      %s74 = sphi 0, %s72
      %s75 = sphi 0, %s74
      %s89 = sphi 0, %s75
      %s95 = sphi 0, %s97
      %s98 = sphi 0, %s95
      %s99 = sphi 0, %s98
      %s115 = sphi 0, %s99
    $region4: #{tpu_custom_call.1} parent=1 // loop_header_branch
      %20 = sbr.rel (%p18) target = $region8
    $region5: #{tpu_custom_call.1} parent=1 // loop_body
      %s22 = ssub.s32 %s17, 1
      %s23 = ssub.s32 %s17, 2
      %s24 = sadd.s32 %s17, 1
      %s25 = ssub.s32 %s17, %s24
      %p26 = scmp.eq.s32.totalorder %s25, 0
      %s28 = sadd.s32 %s27, 1
      %s29 = scalar_select %p26, %s27, %s28
      %p32 = pneg %p26
      %p33 = scmp.eq.s32.totalorder %s17, 1
      %p34 = por %p32, %p33
      %p35 = scmp.ne.s32.totalorder %s27, %s30
      %p36 = scmp.eq.s32.totalorder %s17, 0
      %p37 = por %p35, %p36
      %p38 = scmp.ne.s32.totalorder %s27, %s30
      %p39 = scmp.eq.s32.totalorder %s22, 1
      %p40 = por %p38, %p39
      %p41 = scmp.ne.s32.totalorder %s30, %s31
      %p42 = scmp.eq.s32.totalorder %s22, 0
      %p43 = por %p41, %p42
      %p44 = scmp.ne.s32.totalorder %s30, %s31
      %p45 = scmp.eq.s32.totalorder %s23, 1
      %p46 = por %p44, %p45
      %p48 = scmp.ne.s32.totalorder %s31, %s47
      %p49 = scmp.eq.s32.totalorder %s23, 0
      %p50 = por %p48, %p49
      %s52 = sadd.s32 %s51, 1
      %p55 = scmp.eq.s32.totalorder %s17, 1
      %p56 = scmp.ne.s32.totalorder %s51, %s53
      %p57 = scmp.eq.s32.totalorder %s17, 0
      %p58 = por %p56, %p57
      %p59 = scmp.ne.s32.totalorder %s51, %s53
      %p60 = scmp.eq.s32.totalorder %s22, 1
      %p61 = por %p59, %p60
      %p62 = scmp.ne.s32.totalorder %s53, %s54
      %p63 = scmp.eq.s32.totalorder %s22, 0
      %p64 = por %p62, %p63
      %p65 = scmp.ne.s32.totalorder %s53, %s54
      %p66 = scmp.eq.s32.totalorder %s23, 1
      %p67 = por %p65, %p66
      %p69 = scmp.ne.s32.totalorder %s54, %s68
      %p70 = scmp.eq.s32.totalorder %s23, 0
      %p71 = por %p69, %p70
      %s73 = sadd.s32 %s72, 1
      %p76 = scmp.eq.s32.totalorder %s17, 1
      %p77 = scmp.ne.s32.totalorder %s72, %s74
      %p78 = scmp.eq.s32.totalorder %s17, 0
      %p79 = por %p77, %p78
      %p80 = scmp.ne.s32.totalorder %s72, %s74
      %p81 = scmp.eq.s32.totalorder %s22, 1
      %p82 = por %p80, %p81
      %p83 = scmp.ne.s32.totalorder %s74, %s75
      %p84 = scmp.eq.s32.totalorder %s22, 0
      %p85 = por %p83, %p84
      %p86 = scmp.ne.s32.totalorder %s74, %s75
      %p87 = scmp.eq.s32.totalorder %s23, 1
      %p88 = por %p86, %p87
      %p90 = scmp.ne.s32.totalorder %s75, %s89
      %p91 = scmp.eq.s32.totalorder %s23, 0
      %p92 = por %p90, %p91
      %s93 = ssub.s32 %s17, %s24
      %p94 = scmp.eq.s32.totalorder %s93, 0
      %s96 = sadd.s32 %s95, 1
      %s97 = scalar_select %p94, %s95, %s96
      %p100 = pneg %p94
      %p101 = scmp.eq.s32.totalorder %s17, 1
      %p102 = por %p100, %p101
      %p103 = scmp.ne.s32.totalorder %s95, %s98
      %p104 = scmp.eq.s32.totalorder %s17, 0
      %p105 = por %p103, %p104
      %p106 = scmp.ne.s32.totalorder %s95, %s98
      %p107 = scmp.eq.s32.totalorder %s22, 1
      %p108 = por %p106, %p107
      %p109 = scmp.ne.s32.totalorder %s98, %s99
      %p110 = scmp.eq.s32.totalorder %s22, 0
      %p111 = por %p109, %p110
      %p112 = scmp.ne.s32.totalorder %s98, %s99
      %p113 = scmp.eq.s32.totalorder %s23, 1
      %p114 = por %p112, %p113
      %p116 = scmp.ne.s32.totalorder %s99, %s115
      %p117 = scmp.eq.s32.totalorder %s23, 0
      %p118 = por %p116, %p117
      %p119 = scmp.le.s32.totalorder 1, %s17
      %p120 = scmp.lt.s32.totalorder %s17, 3
      %p121 = pnand %p119, %p120
      %p122 = pneg %p121
      // Predicated region
      $region9: #{tpu_custom_call.1} parent=5 // pred_check
        _
      $region10: #{tpu_custom_call.1} parent=5 // pred_check_branch
        %124 = sbr.rel (%p121) target = $region12
      $region11: #{tpu_custom_call.1} parent=5 // pred_region
        %s125 = ssub.s32 %s17, 1
        // Predicated region
        $region13: #{tpu_custom_call.1} parent=11 // pred_check
          %p126 = pneg %p64
        $region14: #{tpu_custom_call.1} parent=11 // pred_check_branch
          %128 = sbr.rel (%p126) target = $region16
        $region15: #{tpu_custom_call.1} parent=11 // pred_region
          %130 = vsyncadd [#allocation7], 0
          %s132 = sshll.u32 %s1, 4
          %s133 = int_to_ptr.vmem [resolvable:$true] %s132
          %135 = dma.vmem_to_smem %s133, 16, [#allocation8], [#allocation7]
        $region16: #{tpu_custom_call.1} parent=11 // pred_fallthru
          _
        // Predicated region
        $region17: #{tpu_custom_call.1} parent=11 // pred_check
          %p136 = pneg %p85
        $region18: #{tpu_custom_call.1} parent=11 // pred_check_branch
          %138 = sbr.rel (%p136) target = $region20
        $region19: #{tpu_custom_call.1} parent=11 // pred_region
          _
        $region20: #{tpu_custom_call.1} parent=11 // pred_fallthru
          _
      $region12: #{tpu_custom_call.1} parent=5 // pred_fallthru
        _
      %p139 = scmp.lt.s32.totalorder %s17, 2
      // Predicated region
      $region21: #{tpu_custom_call.1} parent=5 // pred_check
        %p140 = pneg %p139
      $region22: #{tpu_custom_call.1} parent=5 // pred_check_branch
        %142 = sbr.rel (%p140) target = $region24
      $region23: #{tpu_custom_call.1} parent=5 // pred_region
        // Predicated region
        $region25: #{tpu_custom_call.1} parent=23 // pred_check
          %p143 = pneg %p37
        $region26: #{tpu_custom_call.1} parent=23 // pred_check_branch
          %145 = sbr.rel (%p143) target = $region28
        $region27: #{tpu_custom_call.1} parent=23 // pred_region
          %s146 = sand.u32 %s27, 1
          %s147 = scalar_lea.sflag [#allocation5], %s146
          %s148 = sand.u32 %s27, 1
          %s149 = smul.addr %s148, 64
          %s150 = scalar_lea.vmem [#allocation4], %s149
          %152 = vsyncadd %s147, 0
          %s153 = smul.addr %s17, 8
          %s154 = smul.addr %s153, 8
          %s155 = scalar_lea.hbm %s0, %s154
          %s156 = sshll.u32 %s155, 4
          %s157 = int_to_ptr.hbm [resolvable:$true] %s156
          %s158 = sshll.u32 %s150, 4
          %s159 = int_to_ptr.vmem [resolvable:$true] %s158
          %164 = dma.hbm_to_vmem [thread:$0]  %s157, 1024, %s159, %s147, 128, 128, 8
        $region28: #{tpu_custom_call.1} parent=23 // pred_fallthru
          _
      $region24: #{tpu_custom_call.1} parent=5 // pred_fallthru
        _
      %p165 = scmp.le.s32.totalorder 1, %s17
      %p166 = scmp.lt.s32.totalorder %s17, 3
      %p167 = pnand %p165, %p166
      %p168 = pneg %p167
      // Predicated region
      $region29: #{tpu_custom_call.1} parent=5 // pred_check
        _
      $region30: #{tpu_custom_call.1} parent=5 // pred_check_branch
        %170 = sbr.rel (%p167) target = $region32
      $region31: #{tpu_custom_call.1} parent=5 // pred_region
        %s171 = ssub.s32 %s17, 1
        %s172 = sand.u32 %s30, 1
        %s173 = scalar_lea.sflag [#allocation5], %s172
        %s174 = sand.u32 %s30, 1
        %s175 = smul.addr %s174, 64
        %s176 = scalar_lea.vmem [#allocation4], %s175
        // Predicated region
        $region33: #{tpu_custom_call.1} parent=31 // pred_check
          %p177 = pneg %p43
        $region34: #{tpu_custom_call.1} parent=31 // pred_check_branch
          %179 = sbr.rel (%p177) target = $region36
        $region35: #{tpu_custom_call.1} parent=31 // pred_region
          %181 = dma.done %s173, 1024
        $region36: #{tpu_custom_call.1} parent=31 // pred_fallthru
          _
        // Predicated region
        $region37: #{tpu_custom_call.1} parent=31 // pred_check
          %p182 = pneg %p64
        $region38: #{tpu_custom_call.1} parent=31 // pred_check_branch
          %184 = sbr.rel (%p182) target = $region40
        $region39: #{tpu_custom_call.1} parent=31 // pred_region
          %186 = dma.done [#allocation7], 16
        $region40: #{tpu_custom_call.1} parent=31 // pred_fallthru
          _
        %187 = sfence
        %s188 = sand.u32 %s30, 1
        %s189 = scalar_lea.sflag [#allocation5], %s188
        %s190 = sand.u32 %s30, 1
        %s191 = smul.addr %s190, 64
        %s192 = scalar_lea.vmem [#allocation4], %s191
        %p193 = pneg %p43
        %p194 = pneg %p40
        %p195 = pneg %p64
        %p196 = pneg %p61
        %p197 = pneg %p85
        %p198 = pneg %p82
        %p199 = pneg %p111
        %p200 = pneg %p108
        %s201 = sand.u32 %s98, 1
        %s202 = scalar_lea.sflag [#allocation6], %s201
        %s203 = sand.u32 %s98, 1
        %s204 = smul.addr %s203, 16
        %s205 = scalar_lea.vmem [#allocation9], %s204
        %v206 = vld [vmem:[%s176] sm:$0xff]
        %v207 = vld [vmem:[%s176 + $0x8] sm:$0xff]
        %v208 = vld [vmem:[%s176 + $0x10] sm:$0xff]
        %v209 = vld [vmem:[%s176 + $0x18] sm:$0xff]
        %v210 = vld [vmem:[%s176 + $0x20] sm:$0xff]
        %v211 = vld [vmem:[%s176 + $0x28] sm:$0xff]
        %v212 = vld [vmem:[%s176 + $0x30] sm:$0xff]
        %v213 = vld [vmem:[%s176 + $0x38] sm:$0xff]
        %vm214 = vcmask 130048
        %v215 = vsel %vm214, %v206, 0.0
        %v216 = vsel %vm214, %v208, 0.0
        %v217 = vadd.f32 %v215, %v216
        %v218 = vsel %vm214, %v210, 0.0
        %v219 = vadd.f32 %v217, %v218
        %v220 = vsel %vm214, %v212, 0.0
        %v221 = vadd.f32 %v219, %v220
        %v222 = vsel %vm214, %v207, 0.0
        %v223 = vsel %vm214, %v209, 0.0
        %v224 = vadd.f32 %v222, %v223
        %v225 = vsel %vm214, %v211, 0.0
        %v226 = vadd.f32 %v224, %v225
        %v227 = vsel %vm214, %v213, 0.0
        %v228 = vadd.f32 %v226, %v227
        %v229 = vrcp.pop 4.0
        %v230 = vmul.f32 4.0, %v229
        %v231 = vsub.f32 1.0, %v230
        %v232 = vmul.f32 %v229, %v231
        %v233 = vadd.f32 %v229, %v232
        %vm234 = vweird.f32 %v229
        %v235 = vsel %vm234, %v229, %v233
        %v236 = vmul.f32 %v221, %v235
        %v237 = vmul.f32 %v228, %v235
        %v238 = vsel %vm214, %v206, -inf
        %v239 = vsel %vm214, %v208, -inf
        %v240 = vsel %vm214, %v210, -inf
        %v241 = vmax.f32 %v238, %v240
        %v242 = vsel %vm214, %v212, -inf
        %v243 = vmax.f32 %v239, %v242
        %v244 = vmax.f32 %v241, %v243
        %v245 = vsel %vm214, %v207, -inf
        %v246 = vsel %vm214, %v209, -inf
        %v247 = vsel %vm214, %v211, -inf
        %v248 = vmax.f32 %v245, %v247
        %v249 = vsel %vm214, %v213, -inf
        %v250 = vmax.f32 %v246, %v249
        %v251 = vmax.f32 %v248, %v250
        %v252 = vadd.f32 %v236, %v244
        %v253 = vadd.f32 %v237, %v251
        %254 = vst [vmem:[#allocation2] sm:$0xff] 0.0
        %255 = vst [vmem:[#allocation2 + $0x8] sm:$0xff] 0.0
        %256 = vst.msk [vmem:[#allocation2 + $0x10] sm:$0xff] %vm214, 0.0
        %257 = vst [vmem:[#allocation2 + $0x18] sm:$0xff] 0.0
        %258 = vst [vmem:[#allocation2 + $0x20] sm:$0xff] 0.0
        %259 = vst.msk [vmem:[#allocation2 + $0x28] sm:$0xff] %vm214, 0.0
        %260 = vst [vmem:[#allocation2 + $0x30] sm:$0xff] 0.0
        %261 = vst [vmem:[#allocation2 + $0x38] sm:$0xff] 0.0
        %262 = vst.msk [vmem:[#allocation2 + $0x40] sm:$0xff] %vm214, 0.0
        %263 = vst [vmem:[#allocation2 + $0x48] sm:$0xff] 0.0
        %264 = vst [vmem:[#allocation2 + $0x50] sm:$0xff] 0.0
        %265 = vst.msk [vmem:[#allocation2 + $0x58] sm:$0xff] %vm214, 0.0
        %266 = vst.msk [vmem:[#allocation2 + $0x20] sm:$0xff] %vm214, %v252
        %267 = vst.msk [vmem:[#allocation2 + $0x38] sm:$0xff] %vm214, %v253
        %s268 = sld [smem:[#allocation3]]
        %v269 = vstv %s268
        %v270 = vadd.f32 %v269, 0.0
        %s271 = sld [smem:[#allocation8]]
        %v272 = vld [vmem:[#allocation2] sm:$0x80]
        %v273 = vld [vmem:[#allocation2 + $0x8] sm:$0x80]
        %v274 = vld [vmem:[#allocation2 + $0x18] sm:$0xff]
        %v275 = vld [vmem:[#allocation2 + $0x20] sm:$0xff]
        %v276 = vld [vmem:[#allocation2 + $0x30] sm:$0x7f]
        %v277 = vld [vmem:[#allocation2 + $0x38] sm:$0x7f]
        %v278 = vstv %s271
        %v279 = vmul.f32 %v278, %v272
        %v280 = vmul.f32 %v278, %v273
        %v281 = vmul.f32 %v278, %v274
        %v282 = vmul.f32 %v278, %v275
        %v283 = vmul.f32 %v278, %v276
        %v284 = vmul.f32 %v278, %v277
        %v285 = vadd.f32 %v270, %v279
        %v286 = vadd.f32 %v270, %v280
        %v287 = vadd.f32 %v270, %v281
        %v288 = vadd.f32 %v270, %v282
        %v289 = vadd.f32 %v270, %v283
        %v290 = vadd.f32 %v270, %v284
        %s291 = sld [smem:[#allocation8 + $0x1]]
        %v292 = vstv %s291
        %v293 = vmul.f32 %v292, %v273
        %v294 = vmul.f32 %v292, %v275
        %v295 = vmul.f32 %v292, %v277
        %299 = vrot.lane.b32.xlu0 %v293, 127
        %v300 = vpop.permute.xlu0 %299
        %301 = vrot.lane.b32.xlu0 %v294, 127
        %v302 = vpop.permute.xlu0 %301
        %303 = vrot.lane.b32.xlu0 %v295, 127
        %v304 = vpop.permute.xlu0 %303
        %v308 = vadd.f32 %v285, %v300
        %v309 = vadd.f32 %v286, %v300
        %v310 = vadd.f32 %v287, %v302
        %v311 = vadd.f32 %v288, %v302
        %v312 = vadd.f32 %v289, %v304
        %v313 = vadd.f32 %v290, %v304
        %s314 = sld [smem:[#allocation8 + $0x2]]
        %v315 = vstv %s314
        %v316 = vmul.f32 %v315, %v273
        %v317 = vmul.f32 %v315, %v275
        %v318 = vmul.f32 %v315, %v277
        %322 = vrot.lane.b32.xlu0 %v316, 126
        %v323 = vpop.permute.xlu0 %322
        %324 = vrot.lane.b32.xlu0 %v317, 126
        %v325 = vpop.permute.xlu0 %324
        %326 = vrot.lane.b32.xlu0 %v318, 126
        %v327 = vpop.permute.xlu0 %326
        %v331 = vadd.f32 %v308, %v323
        %v332 = vadd.f32 %v309, %v323
        %v333 = vadd.f32 %v310, %v325
        %v334 = vadd.f32 %v311, %v325
        %v335 = vadd.f32 %v312, %v327
        %v336 = vadd.f32 %v313, %v327
        %s337 = sld [smem:[#allocation8 + $0x3]]
        %v338 = vld [vmem:[#allocation2 + $0x30] sm:$0xff]
        %v339 = vld [vmem:[#allocation2 + $0x38] sm:$0xff]
        %v340 = vstv %s337
        %v341 = vmul.f32 %v340, %v274
        %v342 = vmul.f32 %v340, %v275
        %v343 = vmul.f32 %v340, %v338
        %v344 = vmul.f32 %v340, %v339
        %vm349 = vcmask 1046528
        %v350 = vrot.slane %v341, 1
        %v351 = vrot.slane %v342, 1
        %v352 = vrot.slane %v343, 1
        %v353 = vsel %vm349, %v350, %v352
        %v354 = vrot.slane %v344, 1
        %v355 = vsel %vm349, %v351, %v354
        %v362 = vadd.f32 %v331, %v350
        %v363 = vadd.f32 %v332, %v351
        %v364 = vadd.f32 %v333, %v353
        %v365 = vadd.f32 %v334, %v355
        %v366 = vadd.f32 %v335, %v352
        %v367 = vadd.f32 %v336, %v354
        %s368 = sld [smem:[#allocation8 + $0x4]]
        %v369 = vstv %s368
        %v370 = vmul.f32 %v369, %v275
        %v371 = vmul.f32 %v369, %v339
        %v374 = vrot.slane %v370, 1
        %v375 = vrot.slane %v371, 1
        %v376 = vsel %vm349, %v374, %v375
        %377 = vrot.lane.b32.xlu0 %v374, 127
        %v378 = vpop.permute.xlu0 %377
        %379 = vrot.lane.b32.xlu0 %v376, 127
        %v380 = vpop.permute.xlu0 %379
        %381 = vrot.lane.b32.xlu0 %v375, 127
        %v382 = vpop.permute.xlu0 %381
        %v386 = vadd.f32 %v362, %v378
        %v387 = vadd.f32 %v363, %v378
        %v388 = vadd.f32 %v364, %v380
        %v389 = vadd.f32 %v365, %v380
        %v390 = vadd.f32 %v366, %v382
        %v391 = vadd.f32 %v367, %v382
        %s392 = sld [smem:[#allocation8 + $0x5]]
        %v393 = vstv %s392
        %v394 = vmul.f32 %v393, %v275
        %v395 = vmul.f32 %v393, %v339
        %v398 = vrot.slane %v394, 1
        %v399 = vrot.slane %v395, 1
        %v400 = vsel %vm349, %v398, %v399
        %401 = vrot.lane.b32.xlu0 %v398, 126
        %v402 = vpop.permute.xlu0 %401
        %403 = vrot.lane.b32.xlu0 %v400, 126
        %v404 = vpop.permute.xlu0 %403
        %405 = vrot.lane.b32.xlu0 %v399, 126
        %v406 = vpop.permute.xlu0 %405
        %v410 = vadd.f32 %v386, %v402
        %v411 = vadd.f32 %v387, %v402
        %v412 = vadd.f32 %v388, %v404
        %v413 = vadd.f32 %v389, %v404
        %v414 = vadd.f32 %v390, %v406
        %v415 = vadd.f32 %v391, %v406
        %s416 = sld [smem:[#allocation8 + $0x6]]
        %v417 = vld [vmem:[#allocation2 + $0x18] sm:$0xfe]
        %v418 = vld [vmem:[#allocation2 + $0x20] sm:$0xfe]
        %v419 = vld [vmem:[#allocation2 + $0x30] sm:$0xff]
        %v420 = vld [vmem:[#allocation2 + $0x38] sm:$0xff]
        %v421 = vld [vmem:[#allocation2 + $0x48] sm:$0x1]
        %v422 = vld [vmem:[#allocation2 + $0x50] sm:$0x1]
        %v423 = vstv %s416
        %v424 = vmul.f32 %v423, %v417
        %v425 = vmul.f32 %v423, %v418
        %v426 = vmul.f32 %v423, %v419
        %v427 = vmul.f32 %v423, %v420
        %v428 = vmul.f32 %v423, %v421
        %v429 = vmul.f32 %v423, %v422
        %vm436 = vcmask 1045504
        %v437 = vrot.slane %v424, 2
        %v438 = vrot.slane %v425, 2
        %v439 = vrot.slane %v426, 2
        %v440 = vsel %vm436, %v437, %v439
        %v441 = vrot.slane %v427, 2
        %v442 = vsel %vm436, %v438, %v441
        %v443 = vrot.slane %v428, 2
        %v444 = vsel %vm436, %v439, %v443
        %v445 = vrot.slane %v429, 2
        %v446 = vsel %vm436, %v441, %v445
        %v453 = vadd.f32 %v410, %v437
        %v454 = vadd.f32 %v411, %v438
        %v455 = vadd.f32 %v412, %v440
        %v456 = vadd.f32 %v413, %v442
        %v457 = vadd.f32 %v414, %v444
        %v458 = vadd.f32 %v415, %v446
        %s459 = sld [smem:[#allocation8 + $0x7]]
        %v460 = vstv %s459
        %v461 = vmul.f32 %v460, %v418
        %v462 = vmul.f32 %v460, %v420
        %v463 = vmul.f32 %v460, %v422
        %v467 = vrot.slane %v461, 2
        %v468 = vrot.slane %v462, 2
        %v469 = vsel %vm436, %v467, %v468
        %v470 = vrot.slane %v463, 2
        %v471 = vsel %vm436, %v468, %v470
        %472 = vrot.lane.b32.xlu0 %v467, 127
        %v473 = vpop.permute.xlu0 %472
        %474 = vrot.lane.b32.xlu0 %v469, 127
        %v475 = vpop.permute.xlu0 %474
        %476 = vrot.lane.b32.xlu0 %v471, 127
        %v477 = vpop.permute.xlu0 %476
        %v481 = vadd.f32 %v453, %v473
        %v482 = vadd.f32 %v454, %v473
        %v483 = vadd.f32 %v455, %v475
        %v484 = vadd.f32 %v456, %v475
        %v485 = vadd.f32 %v457, %v477
        %v486 = vadd.f32 %v458, %v477
        %s487 = sld [smem:[#allocation8 + $0x8]]
        %v488 = vstv %s487
        %v489 = vmul.f32 %v488, %v418
        %v490 = vmul.f32 %v488, %v420
        %v491 = vmul.f32 %v488, %v422
        %v495 = vrot.slane %v489, 2
        %v496 = vrot.slane %v490, 2
        %v497 = vsel %vm436, %v495, %v496
        %v498 = vrot.slane %v491, 2
        %v499 = vsel %vm436, %v496, %v498
        %500 = vrot.lane.b32.xlu0 %v495, 126
        %v501 = vpop.permute.xlu0 %500
        %502 = vrot.lane.b32.xlu0 %v497, 126
        %v503 = vpop.permute.xlu0 %502
        %504 = vrot.lane.b32.xlu0 %v499, 126
        %v505 = vpop.permute.xlu0 %504
        %v509 = vadd.f32 %v481, %v501
        %v510 = vadd.f32 %v482, %v501
        %v511 = vadd.f32 %v483, %v503
        %v512 = vadd.f32 %v484, %v503
        %v513 = vadd.f32 %v485, %v505
        %v514 = vadd.f32 %v486, %v505
        %v515 = vxor.u32 %v509, 2147483648
        %v516 = vxor.u32 %v510, 2147483648
        %v517 = vxor.u32 %v511, 2147483648
        %v518 = vxor.u32 %v512, 2147483648
        %v519 = vxor.u32 %v513, 2147483648
        %v520 = vxor.u32 %v514, 2147483648
        %v521 = vmul.f32 %v515, 1.442695
        %v522 = vpow.pop %v521
        %v523 = vmul.f32 %v516, 1.442695
        %v524 = vpow.pop %v523
        %v525 = vmul.f32 %v517, 1.442695
        %v526 = vpow.pop %v525
        %v527 = vmul.f32 %v518, 1.442695
        %v528 = vpow.pop %v527
        %v529 = vmul.f32 %v519, 1.442695
        %v530 = vpow.pop %v529
        %v531 = vmul.f32 %v520, 1.442695
        %v532 = vpow.pop %v531
        %v533 = vadd.f32 %v522, 1.0
        %v534 = vadd.f32 %v524, 1.0
        %v535 = vadd.f32 %v526, 1.0
        %v536 = vadd.f32 %v528, 1.0
        %v537 = vadd.f32 %v530, 1.0
        %v538 = vadd.f32 %v532, 1.0
        %v539 = vrcp.pop %v533
        %v540 = vmul.f32 %v533, %v539
        %v541 = vsub.f32 1.0, %v540
        %v542 = vmul.f32 %v539, %v541
        %v543 = vadd.f32 %v539, %v542
        %vm544 = vweird.f32 %v533
        %vm545 = vweird.f32 %v539
        %vm546 = vmor %vm544, %vm545
        %v547 = vsel %vm546, %v539, %v543
        %v548 = vand.u32 2147483647, %v533
        %vm549 = vcmp.eq.f32.partialorder %v548, 8.507059e+37
        %v550 = vand.u32 %v533, 2147483648
        %v551 = vor.u32 1.1754944e-38, %v550
        %v552 = vsel %vm549, %v551, %v547
        %v553 = vmul.f32 1.0, %v552
        %v554 = vrcp.pop %v534
        %v555 = vmul.f32 %v534, %v554
        %v556 = vsub.f32 1.0, %v555
        %v557 = vmul.f32 %v554, %v556
        %v558 = vadd.f32 %v554, %v557
        %vm559 = vweird.f32 %v534
        %vm560 = vweird.f32 %v554
        %vm561 = vmor %vm559, %vm560
        %v562 = vsel %vm561, %v554, %v558
        %v563 = vand.u32 2147483647, %v534
        %vm564 = vcmp.eq.f32.partialorder %v563, 8.507059e+37
        %v565 = vand.u32 %v534, 2147483648
        %v566 = vor.u32 1.1754944e-38, %v565
        %v567 = vsel %vm564, %v566, %v562
        %v568 = vmul.f32 1.0, %v567
        %v569 = vrcp.pop %v535
        %v570 = vmul.f32 %v535, %v569
        %v571 = vsub.f32 1.0, %v570
        %v572 = vmul.f32 %v569, %v571
        %v573 = vadd.f32 %v569, %v572
        %vm574 = vweird.f32 %v535
        %vm575 = vweird.f32 %v569
        %vm576 = vmor %vm574, %vm575
        %v577 = vsel %vm576, %v569, %v573
        %v578 = vand.u32 2147483647, %v535
        %vm579 = vcmp.eq.f32.partialorder %v578, 8.507059e+37
        %v580 = vand.u32 %v535, 2147483648
        %v581 = vor.u32 1.1754944e-38, %v580
        %v582 = vsel %vm579, %v581, %v577
        %v583 = vmul.f32 1.0, %v582
        %v584 = vrcp.pop %v536
        %v585 = vmul.f32 %v536, %v584
        %v586 = vsub.f32 1.0, %v585
        %v587 = vmul.f32 %v584, %v586
        %v588 = vadd.f32 %v584, %v587
        %vm589 = vweird.f32 %v536
        %vm590 = vweird.f32 %v584
        %vm591 = vmor %vm589, %vm590
        %v592 = vsel %vm591, %v584, %v588
        %v593 = vand.u32 2147483647, %v536
        %vm594 = vcmp.eq.f32.partialorder %v593, 8.507059e+37
        %v595 = vand.u32 %v536, 2147483648
        %v596 = vor.u32 1.1754944e-38, %v595
        %v597 = vsel %vm594, %v596, %v592
        %v598 = vmul.f32 1.0, %v597
        %v599 = vrcp.pop %v537
        %v600 = vmul.f32 %v537, %v599
        %v601 = vsub.f32 1.0, %v600
        %v602 = vmul.f32 %v599, %v601
        %v603 = vadd.f32 %v599, %v602
        %vm604 = vweird.f32 %v537
        %vm605 = vweird.f32 %v599
        %vm606 = vmor %vm604, %vm605
        %v607 = vsel %vm606, %v599, %v603
        %v608 = vand.u32 2147483647, %v537
        %vm609 = vcmp.eq.f32.partialorder %v608, 8.507059e+37
        %v610 = vand.u32 %v537, 2147483648
        %v611 = vor.u32 1.1754944e-38, %v610
        %v612 = vsel %vm609, %v611, %v607
        %v613 = vmul.f32 1.0, %v612
        %v614 = vrcp.pop %v538
        %v615 = vmul.f32 %v538, %v614
        %v616 = vsub.f32 1.0, %v615
        %v617 = vmul.f32 %v614, %v616
        %v618 = vadd.f32 %v614, %v617
        %vm619 = vweird.f32 %v538
        %vm620 = vweird.f32 %v614
        %vm621 = vmor %vm619, %vm620
        %v622 = vsel %vm621, %v614, %v618
        %v623 = vand.u32 2147483647, %v538
        %vm624 = vcmp.eq.f32.partialorder %v623, 8.507059e+37
        %v625 = vand.u32 %v538, 2147483648
        %v626 = vor.u32 1.1754944e-38, %v625
        %v627 = vsel %vm624, %v626, %v622
        %v628 = vmul.f32 1.0, %v627
        %635 = vrot.lane.b32.xlu0 %v553, 1
        %v636 = vpop.permute.xlu0 %635
        %637 = vrot.lane.b32.xlu0 %v568, 1
        %v638 = vpop.permute.xlu0 %637
        %639 = vrot.lane.b32.xlu0 %v583, 1
        %v640 = vpop.permute.xlu0 %639
        %641 = vrot.lane.b32.xlu0 %v598, 1
        %v642 = vpop.permute.xlu0 %641
        %643 = vrot.lane.b32.xlu0 %v613, 1
        %v644 = vpop.permute.xlu0 %643
        %645 = vrot.lane.b32.xlu0 %v628, 1
        %v646 = vpop.permute.xlu0 %645
        %vm647 = vcmask 7168
        %v648 = vsel %vm647, %v636, %v638
        %v649 = vsel %vm647, %v640, %v642
        %v650 = vsel %vm647, %v644, %v646
        %vm654 = vcmask 130055
        %655 = vst.msk [vmem:[%s205 - $0x7] sm:$0x80] %vm654, %v648
        %656 = vst.msk [vmem:[%s205 + $0x1] sm:$0xff] %vm214, %v649
        %vm657 = vcmask 129024
        %658 = vst.msk [vmem:[%s205 + $0x9] sm:$0x7f] %vm657, %v650
        %s659 = sand.u32 %s98, 1
        %s660 = scalar_lea.sflag [#allocation6], %s659
        %s661 = sand.u32 %s98, 1
        %s662 = smul.addr %s661, 16
        %s663 = scalar_lea.vmem [#allocation9], %s662
        // Predicated region
        $region41: #{tpu_custom_call.1} parent=31 // pred_check
          %p664 = pneg %p108
        $region42: #{tpu_custom_call.1} parent=31 // pred_check_branch
          %666 = sbr.rel (%p664) target = $region44
        $region43: #{tpu_custom_call.1} parent=31 // pred_region
          %668 = vsyncadd %s660, 0
          %s669 = smul.addr %s22, 2
          %s670 = smul.addr %s669, 8
          %s671 = scalar_lea.hbm %s3, %s670
          %s672 = sshll.u32 %s663, 4
          %s673 = int_to_ptr.vmem [resolvable:$true] %s672
          %s674 = sshll.u32 %s671, 4
          %s675 = int_to_ptr.hbm [resolvable:$true] %s674
          %680 = dma.vmem_to_hbm [thread:$0]  %s673, 256, %s675, %s660, 128, 128, 8
        $region44: #{tpu_custom_call.1} parent=31 // pred_fallthru
          _
      $region32: #{tpu_custom_call.1} parent=5 // pred_fallthru
        _
      %p681 = scmp.le.s32.totalorder 2, %s17
      // Predicated region
      $region45: #{tpu_custom_call.1} parent=5 // pred_check
        %p682 = pneg %p681
      $region46: #{tpu_custom_call.1} parent=5 // pred_check_branch
        %684 = sbr.rel (%p682) target = $region48
      $region47: #{tpu_custom_call.1} parent=5 // pred_region
        %s685 = ssub.s32 %s17, 2
        // Predicated region
        $region49: #{tpu_custom_call.1} parent=47 // pred_check
          %p686 = pneg %p114
        $region50: #{tpu_custom_call.1} parent=47 // pred_check_branch
          %688 = sbr.rel (%p686) target = $region52
        $region51: #{tpu_custom_call.1} parent=47 // pred_region
          %s689 = sand.u32 %s99, 1
          %s690 = scalar_lea.sflag [#allocation6], %s689
          %s691 = sand.u32 %s99, 1
          %s692 = smul.addr %s691, 16
          %s693 = scalar_lea.vmem [#allocation9], %s692
          %695 = dma.done %s690, 256
        $region52: #{tpu_custom_call.1} parent=47 // pred_fallthru
          _
      $region48: #{tpu_custom_call.1} parent=5 // pred_fallthru
        _
    $region6: #{tpu_custom_call.1} parent=1 // loop_footer
      %s21 = sadd.s32 1, %s17
    $region7: #{tpu_custom_call.1} parent=1 // loop_footer_branch
      %16 = sbr.rel target = $region3
    $region8: #{tpu_custom_call.1} parent=1 // loop_exit
      _
    %696 = vsyncpa [#allocation5], 1
    %s697 = scalar_lea.sflag [#allocation5], 1
    %698 = vsyncpa %s697, 1
    %699 = vsyncpa [#allocation6], 1
    %s700 = scalar_lea.sflag [#allocation6], 1
    %701 = vsyncpa %s700, 1
    %702 = vsyncpa [#allocation7], 1
    %s703 = scalar_lea.sflag [#allocation7], 1
    %704 = vsyncpa %s703, 1

</llo_original>
